<compile_context>
chip_gen: v5e
topology: v5e:2x2
jax: 0.10.0
libtpu: 0.0.40
codegen_flags: <defaults>
</compile_context>

<pallas_src>
import functools

import jax
import jax.numpy as jnp
from jax.experimental import pallas as pl
from jax.experimental.pallas import tpu as pltpu

LEAKY_SLOPE = 0.01   # nn.LeakyReLU default negative_slope
SUBLANE = 8
H1 = 256             # layer1 width
H2 = 100             # layer2 width (first return value)


def _leaky_relu(x):
    return jnp.where(x > 0, x, LEAKY_SLOPE * x)


def _round_up(n, m):
    return ((n + m - 1) // m) * m


def _vmem_limit_bytes():
    """Scoped-VMEM limit to request: adapts to the chip, safe on v7x's 64 MiB."""
    cap = 64 << 20                       # assume the smallest chip if unknown
    try:
        cap = int(getattr(pltpu.get_tpu_info(), "vmem_capacity_bytes", cap))
    except Exception:                    # query unavailable on this jax build
        pass
    return min(96 << 20, int(cap * 0.75))   # leave headroom for compiler scratch


def _pick_tile_b(bp, in_nodes, num_classes, cap, x_bytes, block_budget,
                 min_steps=4):
    """Largest sublane-aligned divisor of `bp` that fits the VMEM budget and
    (when possible) leaves >= min_steps grid steps for pipeline overlap and
    the v7x dual-TensorCore split."""
    # Per-batch-row VMEM: double-buffered x block, double-buffered h2/out
    # blocks (f32) and the f32 h1/h2/out temporaries inside the kernel.
    per_row = (2 * in_nodes * x_bytes
               + 2 * (H2 + num_classes) * 4
               + (H1 + H2 + num_classes) * 4)
    # Resident weights/biases (counted double-buffered to be conservative).
    weight_bytes = 2 * ((in_nodes * H1 + H1 * H2 + H2 * num_classes) * x_bytes
                        + (H1 + H2 + num_classes) * 4)
    budget = max(block_budget - weight_bytes, SUBLANE * per_row)
    vmem_rows = max(SUBLANE, (budget // per_row) // SUBLANE * SUBLANE)
    cap = max(SUBLANE, min(int(cap), int(vmem_rows), int(bp)))
    candidates = [t for t in range(SUBLANE, cap + 1, SUBLANE) if bp % t == 0]
    good = [t for t in candidates if bp // t >= min_steps]
    return max(good) if good else max(candidates)


def mlp_kernel(x_ref, w1_ref, b1_ref, w2_ref, b2_ref, w3_ref, b3_ref,
               h_ref, out_ref):
    # One batch tile per grid step; all three matmuls fused so intermediates
    # never touch HBM.  Weights/biases use constant index_maps so they stay
    # VMEM-resident across the whole grid.
    x = x_ref[...]

    h1 = jnp.dot(x, w1_ref[...], preferred_element_type=jnp.float32) + b1_ref[...]
    h1 = _leaky_relu(h1)                          # f32 VPU work (v5e-safe)

    h2 = jnp.dot(h1.astype(w2_ref.dtype), w2_ref[...],
                 preferred_element_type=jnp.float32) + b2_ref[...]
    h2 = _leaky_relu(h2)
    h_ref[...] = h2.astype(h_ref.dtype)

    out = jnp.dot(h2.astype(w3_ref.dtype), w3_ref[...],
                  preferred_element_type=jnp.float32) + b3_ref[...]
    out_ref[...] = out.astype(out_ref.dtype)


@functools.partial(jax.jit, static_argnames=("tile_b", "hbm_dtype"))
def image_classifier_forward(x, params, tile_b=1024, hbm_dtype=None):
    """x: (B, in_nodes, 1, 1) or (B, in_nodes). Returns (h2, out) like the module.

    hbm_dtype: optional storage dtype for x and the weight matrices (e.g.
    jnp.bfloat16 on v5e/v6e/v7x to halve HBM read traffic).  Bias adds and
    LeakyReLUs always run in f32 on the matmul accumulator; outputs are f32.
    """
    # torch.squeeze(x) on (B, in_nodes, 1, 1) -> (B, in_nodes).  reshape is
    # used instead of squeeze so the in_nodes==1 case keeps the right shape.
    x2d = x.reshape(x.shape[0], -1)
    B, in_nodes = x2d.shape

    w1, b1, w2, b2, w3, b3 = (params[k] for k in ("w1", "b1", "w2", "b2", "w3", "b3"))
    num_classes = w3.shape[1]

    if hbm_dtype is not None:
        x2d = x2d.astype(hbm_dtype)
        w1, w2, w3 = (w.astype(hbm_dtype) for w in (w1, w2, w3))
    b1, b2, b3 = (b.astype(jnp.float32).reshape(1, -1) for b in (b1, b2, b3))

    x_bytes = jnp.dtype(x2d.dtype).itemsize
    vmem_limit = _vmem_limit_bytes()

    # ---- batch tiling: TILE_B always divides the (sublane-aligned) batch ----
    Bp = _round_up(max(B, SUBLANE), SUBLANE)
    TILE_B = _pick_tile_b(Bp, in_nodes, num_classes, tile_b, x_bytes,
                          block_budget=int(vmem_limit * 0.8))
    if Bp != B:
        # Only when B is not a multiple of 8 (or B < 8): small zero pad.
        # Zero rows are numerically harmless and stripped below.
        x2d = jnp.pad(x2d, ((0, Bp - B), (0, 0)))
    grid = (Bp // TILE_B,)

    h2p, outp = pl.pallas_call(
        mlp_kernel,
        out_shape=(
            jax.ShapeDtypeStruct((Bp, H2), jnp.float32),
            jax.ShapeDtypeStruct((Bp, num_classes), jnp.float32),
        ),
        grid=grid,
        in_specs=[
            # x: batch-tiled, double-buffered across the grid.
            # TODO(synk): pipeline_mode=pl.Buffered(3) here if v7x profiling
            # shows exposed DMA latency with small tiles.
            pl.BlockSpec((TILE_B, in_nodes), lambda i: (i, 0)),
            # Weights / biases: constant block index -> stay VMEM-resident.
            pl.BlockSpec((in_nodes, H1),       lambda i: (0, 0)),
            pl.BlockSpec((1, H1),              lambda i: (0, 0)),
            pl.BlockSpec((H1, H2),             lambda i: (0, 0)),
            pl.BlockSpec((1, H2),              lambda i: (0, 0)),
            pl.BlockSpec((H2, num_classes),    lambda i: (0, 0)),
            pl.BlockSpec((1, num_classes),     lambda i: (0, 0)),
        ],
        out_specs=(
            # Unpadded widths written directly (masked vst beats pad+slice).
            pl.BlockSpec((TILE_B, H2),          lambda i: (i, 0)),
            pl.BlockSpec((TILE_B, num_classes), lambda i: (i, 0)),
        ),
        compiler_params=pltpu.CompilerParams(
            dimension_semantics=("parallel",),   # v7x: both TCs split the tiles
            vmem_limit_bytes=vmem_limit,         # raise the 16/32 MiB default
        ),
    )(x2d, w1, b1, w2, b2, w3, b3)

    if Bp != B:   # strip the (rare) batch pad; no lane slicing needed anymore
        h2p, outp = h2p[:B], outp[:B]
    return h2p, outp


def init_params(key, in_nodes, num_classes):
    """Deterministic synthetic init (initialize_weights stand-in)."""
    ks = jax.random.split(key, 6)
    scale = 0.05
    return {
        "w1": scale * jax.random.normal(ks[0], (in_nodes, H1), jnp.float32),
        "b1": scale * jax.random.normal(ks[1], (H1,), jnp.float32),
        "w2": scale * jax.random.normal(ks[2], (H1, H2), jnp.float32),
        "b2": scale * jax.random.normal(ks[3], (H2,), jnp.float32),
        "w3": scale * jax.random.normal(ks[4], (H2, num_classes), jnp.float32),
        "b3": scale * jax.random.normal(ks[5], (num_classes,), jnp.float32),
    }


def _reference(x, params):
    xr = x.reshape(x.shape[0], -1)
    r1 = _leaky_relu(xr @ params["w1"] + params["b1"])
    r2 = _leaky_relu(r1 @ params["w2"] + params["b2"])
    return r2, r2 @ params["w3"] + params["b3"]


if __name__ == "__main__":
    key = jax.random.PRNGKey(0)
    B, in_nodes, num_classes = 2, 32, 10

    k_x, k_p, k_x2, k_x3 = jax.random.split(key, 4)
    # Typical usage: feature vector with trailing singleton spatial dims.
    x = jax.random.normal(k_x, (B, in_nodes, 1, 1), jnp.float32)
    params = init_params(k_p, in_nodes, num_classes)

    h2, out = image_classifier_forward(x, params)
    jax.block_until_ready((h2, out))
    r2, r_out = _reference(x, params)
    assert h2.shape == (B, H2) and out.shape == (B, num_classes)
    assert jnp.allclose(h2, r2, atol=1e-5), "layer2 mismatch"
    assert jnp.allclose(out, r_out, atol=1e-5), "head mismatch"

    # Multi-step grid + ragged-batch pad path (B=20, TILE_B=8 -> 3 tiles).
    xb = jax.random.normal(k_x2, (20, in_nodes, 1, 1), jnp.float32)
    h2b, outb = image_classifier_forward(xb, params, tile_b=8)
    jax.block_until_ready((h2b, outb))
    r2b, r_outb = _reference(xb, params)
    assert jnp.allclose(h2b, r2b, atol=1e-5), "gridded layer2 mismatch"
    assert jnp.allclose(outb, r_outb, atol=1e-5), "gridded head mismatch"

    # bf16-in-HBM path (halves the dominant x/W read on v5e/v6e/v7x); all
    # elementwise math stays f32, so only bf16 input rounding differs.
    xc = jax.random.normal(k_x3, (16, in_nodes, 1, 1), jnp.float32)
    h2c, outc = image_classifier_forward(xc, params, hbm_dtype=jnp.bfloat16)
    jax.block_until_ready((h2c, outc))
    r2c, r_outc = _reference(xc, params)
    assert jnp.allclose(h2c, r2c, atol=2e-2), "bf16 layer2 mismatch"
    assert jnp.allclose(outc, r_outc, atol=2e-2), "bf16 head mismatch"

    print("KERNEL_OK")
</pallas_src>

<mosaic_0001>
module attributes {stable_mosaic.version = 11 : i64} {
  func.func @mlp_kernel(%arg0: i32, %arg1: memref<8x32xf32, #tpu.memory_space<vmem>>, %arg2: memref<32x256xf32, #tpu.memory_space<vmem>>, %arg3: memref<1x256xf32, #tpu.memory_space<vmem>>, %arg4: memref<256x100xf32, #tpu.memory_space<vmem>>, %arg5: memref<1x100xf32, #tpu.memory_space<vmem>>, %arg6: memref<100x10xf32, #tpu.memory_space<vmem>>, %arg7: memref<1x10xf32, #tpu.memory_space<vmem>>, %arg8: memref<8x100xf32, #tpu.memory_space<vmem>>, %arg9: memref<8x10xf32, #tpu.memory_space<vmem>>) attributes {dimension_semantics = [#tpu.dimension_semantics<parallel>], iteration_bounds = array<i64: 1>, scalar_prefetch = 0 : i64, scratch_operands = 0 : i64, tpu.core_type = #tpu.core_type<tc>, window_params = [{transform_indices = @transform_0, window_bounds = array<i64: 8, 32>}, {pipeline_mode = #tpu.pipeline_mode<synchronous>, transform_indices = @transform_1, window_bounds = array<i64: 32, 256>}, {pipeline_mode = #tpu.pipeline_mode<synchronous>, transform_indices = @transform_2, window_bounds = array<i64: 1, 256>}, {pipeline_mode = #tpu.pipeline_mode<synchronous>, transform_indices = @transform_3, window_bounds = array<i64: 256, 100>}, {pipeline_mode = #tpu.pipeline_mode<synchronous>, transform_indices = @transform_4, window_bounds = array<i64: 1, 100>}, {pipeline_mode = #tpu.pipeline_mode<synchronous>, transform_indices = @transform_5, window_bounds = array<i64: 100, 10>}, {pipeline_mode = #tpu.pipeline_mode<synchronous>, transform_indices = @transform_6, window_bounds = array<i64: 1, 10>}, {transform_indices = @transform_7, window_bounds = array<i64: 8, 100>}, {transform_indices = @transform_8, window_bounds = array<i64: 8, 10>}]} {
    %c0 = arith.constant 0 : index
    %c0_0 = arith.constant 0 : index
    %0 = vector.load %arg1[%c0, %c0_0] : memref<8x32xf32, #tpu.memory_space<vmem>>, vector<8x32xf32>
    %c0_1 = arith.constant 0 : index
    %c0_2 = arith.constant 0 : index
    %1 = vector.load %arg2[%c0_1, %c0_2] : memref<32x256xf32, #tpu.memory_space<vmem>>, vector<32x256xf32>
    %cst = arith.constant dense<0.000000e+00> : vector<8x256xf32>
    %2 = tpu.matmul %0, %1, %cst {dimension_numbers = #tpu.dot_dimension_numbers<[1], [0], [0], [1], [0, 0, 1, 1], [], []>} : vector<8x32xf32>, vector<32x256xf32>, vector<8x256xf32> -> vector<8x256xf32>
    %c0_3 = arith.constant 0 : index
    %c0_4 = arith.constant 0 : index
    %3 = vector.load %arg3[%c0_3, %c0_4] : memref<1x256xf32, #tpu.memory_space<vmem>>, vector<1x256xf32>
    %4 = vector.broadcast %3 : vector<1x256xf32> to vector<8x256xf32>
    %5 = arith.addf %2, %4 : vector<8x256xf32>
    %cst_5 = arith.constant 0.000000e+00 : f32
    %6 = vector.broadcast %cst_5 : f32 to vector<8x256xf32>
    %7 = arith.cmpf ogt, %5, %6 : vector<8x256xf32>
    %cst_6 = arith.constant 0.00999999977 : f32
    %8 = vector.broadcast %cst_6 : f32 to vector<8x256xf32>
    %9 = arith.mulf %8, %5 : vector<8x256xf32>
    %10 = arith.select %7, %5, %9 : vector<8x256xi1>, vector<8x256xf32>
    %c0_7 = arith.constant 0 : index
    %c0_8 = arith.constant 0 : index
    %11 = vector.load %arg4[%c0_7, %c0_8] : memref<256x100xf32, #tpu.memory_space<vmem>>, vector<256x100xf32>
    %cst_9 = arith.constant dense<0.000000e+00> : vector<8x100xf32>
    %12 = tpu.matmul %10, %11, %cst_9 {dimension_numbers = #tpu.dot_dimension_numbers<[1], [0], [0], [1], [0, 0, 1, 1], [], []>} : vector<8x256xf32>, vector<256x100xf32>, vector<8x100xf32> -> vector<8x100xf32>
    %c0_10 = arith.constant 0 : index
    %c0_11 = arith.constant 0 : index
    %13 = vector.load %arg5[%c0_10, %c0_11] : memref<1x100xf32, #tpu.memory_space<vmem>>, vector<1x100xf32>
    %14 = vector.broadcast %13 : vector<1x100xf32> to vector<8x100xf32>
    %15 = arith.addf %12, %14 : vector<8x100xf32>
    %cst_12 = arith.constant 0.000000e+00 : f32
    %16 = vector.broadcast %cst_12 : f32 to vector<8x100xf32>
    %17 = arith.cmpf ogt, %15, %16 : vector<8x100xf32>
    %cst_13 = arith.constant 0.00999999977 : f32
    %18 = vector.broadcast %cst_13 : f32 to vector<8x100xf32>
    %19 = arith.mulf %18, %15 : vector<8x100xf32>
    %20 = arith.select %17, %15, %19 : vector<8x100xi1>, vector<8x100xf32>
    %c0_14 = arith.constant 0 : index
    %c0_15 = arith.constant 0 : index
    %21 = vector.load %arg8[%c0_14, %c0_15] : memref<8x100xf32, #tpu.memory_space<vmem>>, vector<8x100xf32>
    tpu.vector_store %arg8[%c0_14, %c0_15], %20 {strides = array<i32>} : memref<8x100xf32, #tpu.memory_space<vmem>>, vector<8x100xf32>,
    %c0_16 = arith.constant 0 : index
    %c0_17 = arith.constant 0 : index
    %22 = vector.load %arg6[%c0_16, %c0_17] : memref<100x10xf32, #tpu.memory_space<vmem>>, vector<100x10xf32>
    %cst_18 = arith.constant dense<0.000000e+00> : vector<8x10xf32>
    %23 = tpu.matmul %20, %22, %cst_18 {dimension_numbers = #tpu.dot_dimension_numbers<[1], [0], [0], [1], [0, 0, 1, 1], [], []>} : vector<8x100xf32>, vector<100x10xf32>, vector<8x10xf32> -> vector<8x10xf32>
    %c0_19 = arith.constant 0 : index
    %c0_20 = arith.constant 0 : index
    %24 = vector.load %arg7[%c0_19, %c0_20] : memref<1x10xf32, #tpu.memory_space<vmem>>, vector<1x10xf32>
    %25 = vector.broadcast %24 : vector<1x10xf32> to vector<8x10xf32>
    %26 = arith.addf %23, %25 : vector<8x10xf32>
    %c0_21 = arith.constant 0 : index
    %c0_22 = arith.constant 0 : index
    %27 = vector.load %arg9[%c0_21, %c0_22] : memref<8x10xf32, #tpu.memory_space<vmem>>, vector<8x10xf32>
    tpu.vector_store %arg9[%c0_21, %c0_22], %26 {strides = array<i32>} : memref<8x10xf32, #tpu.memory_space<vmem>>, vector<8x10xf32>,
    return
  }
  func.func @transform_0(%arg0: i32) -> (i32, i32) {
    %c0_i32 = arith.constant 0 : i32
    %c0_i32_0 = arith.constant 0 : i32
    return %arg0, %c0_i32 : i32, i32
  }
  func.func @transform_1(%arg0: i32) -> (i32, i32) {
    %c0_i32 = arith.constant 0 : i32
    %c0_i32_0 = arith.constant 0 : i32
    %c0_i32_1 = arith.constant 0 : i32
    return %c0_i32, %c0_i32_0 : i32, i32
  }
  func.func @transform_2(%arg0: i32) -> (i32, i32) {
    %c0_i32 = arith.constant 0 : i32
    %c0_i32_0 = arith.constant 0 : i32
    %c0_i32_1 = arith.constant 0 : i32
    return %c0_i32, %c0_i32_0 : i32, i32
  }
  func.func @transform_3(%arg0: i32) -> (i32, i32) {
    %c0_i32 = arith.constant 0 : i32
    %c0_i32_0 = arith.constant 0 : i32
    %c0_i32_1 = arith.constant 0 : i32
    return %c0_i32, %c0_i32_0 : i32, i32
  }
  func.func @transform_4(%arg0: i32) -> (i32, i32) {
    %c0_i32 = arith.constant 0 : i32
    %c0_i32_0 = arith.constant 0 : i32
    %c0_i32_1 = arith.constant 0 : i32
    return %c0_i32, %c0_i32_0 : i32, i32
  }
  func.func @transform_5(%arg0: i32) -> (i32, i32) {
    %c0_i32 = arith.constant 0 : i32
    %c0_i32_0 = arith.constant 0 : i32
    %c0_i32_1 = arith.constant 0 : i32
    return %c0_i32, %c0_i32_0 : i32, i32
  }
  func.func @transform_6(%arg0: i32) -> (i32, i32) {
    %c0_i32 = arith.constant 0 : i32
    %c0_i32_0 = arith.constant 0 : i32
    %c0_i32_1 = arith.constant 0 : i32
    return %c0_i32, %c0_i32_0 : i32, i32
  }
  func.func @transform_7(%arg0: i32) -> (i32, i32) {
    %c0_i32 = arith.constant 0 : i32
    %c0_i32_0 = arith.constant 0 : i32
    return %arg0, %c0_i32 : i32, i32
  }
  func.func @transform_8(%arg0: i32) -> (i32, i32) {
    %c0_i32 = arith.constant 0 : i32
    %c0_i32_0 = arith.constant 0 : i32
    return %arg0, %c0_i32 : i32, i32
  }
}

</mosaic_0001>

<llo_original>
// kernel: image_classifier_forward.1
$region0: #{image_classifier_forward.1}
  #allocation0 [shape = 'u32[]', space=smem, size = 0x4, offset = 0x4, fixed_abs, tag = 'smem constant byte address 0x4 - core index']
  #allocation1 [shape = 'u32[72,128]{1,0:T(1,128)}', space=vmem, size = 0x9000, scoped, tag = 'internal scratch']
  %s0 = inlined_call_operand.vmem [shape: f32[8,32], index: 0, kind: input, shape index: {}]
  %s1 = inlined_call_operand.vmem [shape: f32[32,256], index: 1, kind: input, shape index: {}]
  %s2 = inlined_call_operand.vmem [shape: f32[1,256], index: 2, kind: input, shape index: {}]
  %s3 = inlined_call_operand.vmem [shape: f32[256,100], index: 3, kind: input, shape index: {}]
  %s4 = inlined_call_operand.vmem [shape: f32[1,100], index: 4, kind: input, shape index: {}]
  %s5 = inlined_call_operand.vmem [shape: f32[100,10], index: 5, kind: input, shape index: {}]
  %s6 = inlined_call_operand.vmem [shape: f32[1,10], index: 6, kind: input, shape index: {}]
  %s7 = inlined_call_operand.vmem [shape: f32[8,100], index: 7, kind: output, shape index: {0}]
  %s8 = inlined_call_operand.vmem [shape: f32[8,10], index: 8, kind: output, shape index: {1}]
  %9 = xla_tuple %s7, %s8
  %s10 = sld [smem:[#allocation0]]
  $region46: #{image_classifier_forward.1} parent=0
    _
  %s12 = ssub.s32 1, %s10
  %s13 = scalar_select 0, %s12, %s10
  // Predicated region
  $region2: #{image_classifier_forward.1} parent=0 // pred_check
    _
  $region3: #{image_classifier_forward.1} parent=0 // pred_check_branch
    %15 = sbr.rel (0) target = $region5
  $region4: #{image_classifier_forward.1} parent=0 // pred_region
    _
  $region5: #{image_classifier_forward.1} parent=0 // pred_fallthru
    _
  // Predicated region
  $region6: #{image_classifier_forward.1} parent=0 // pred_check
    _
  $region7: #{image_classifier_forward.1} parent=0 // pred_check_branch
    %17 = sbr.rel (0) target = $region9
  $region8: #{image_classifier_forward.1} parent=0 // pred_region
    _
  $region9: #{image_classifier_forward.1} parent=0 // pred_fallthru
    _
  // Predicated region
  $region10: #{image_classifier_forward.1} parent=0 // pred_check
    _
  $region11: #{image_classifier_forward.1} parent=0 // pred_check_branch
    %19 = sbr.rel (0) target = $region13
  $region12: #{image_classifier_forward.1} parent=0 // pred_region
    _
  $region13: #{image_classifier_forward.1} parent=0 // pred_fallthru
    _
  // Predicated region
  $region14: #{image_classifier_forward.1} parent=0 // pred_check
    _
  $region15: #{image_classifier_forward.1} parent=0 // pred_check_branch
    %21 = sbr.rel (0) target = $region17
  $region16: #{image_classifier_forward.1} parent=0 // pred_region
    _
  $region17: #{image_classifier_forward.1} parent=0 // pred_fallthru
    _
  // Predicated region
  $region18: #{image_classifier_forward.1} parent=0 // pred_check
    _
  $region19: #{image_classifier_forward.1} parent=0 // pred_check_branch
    %23 = sbr.rel (0) target = $region21
  $region20: #{image_classifier_forward.1} parent=0 // pred_region
    _
  $region21: #{image_classifier_forward.1} parent=0 // pred_fallthru
    _
  // Predicated region
  $region22: #{image_classifier_forward.1} parent=0 // pred_check
    _
  $region23: #{image_classifier_forward.1} parent=0 // pred_check_branch
    %25 = sbr.rel (0) target = $region25
  $region24: #{image_classifier_forward.1} parent=0 // pred_region
    _
  $region25: #{image_classifier_forward.1} parent=0 // pred_fallthru
    _
  // Predicated region
  $region26: #{image_classifier_forward.1} parent=0 // pred_check
    _
  $region27: #{image_classifier_forward.1} parent=0 // pred_check_branch
    %27 = sbr.rel (0) target = $region29
  $region28: #{image_classifier_forward.1} parent=0 // pred_region
    _
  $region29: #{image_classifier_forward.1} parent=0 // pred_fallthru
    _
  %v28 = vld [vmem:[%s0] sm:$0xff]
  %v29 = vld [vmem:[%s1] sm:$0xff]
  %v30 = vld [vmem:[%s1 + $0x8] sm:$0xff]
  %v31 = vld [vmem:[%s1 + $0x10] sm:$0xff]
  %v32 = vld [vmem:[%s1 + $0x18] sm:$0xff]
  %v33 = vld [vmem:[%s1 + $0x20] sm:$0xff]
  %v34 = vld [vmem:[%s1 + $0x28] sm:$0xff]
  %v35 = vld [vmem:[%s1 + $0x30] sm:$0xff]
  %v36 = vld [vmem:[%s1 + $0x38] sm:$0xff]
  %v37 = vld [vmem:[%s2] sm:$0x3]
  %v39 = vperm.slane %v37, 0
  %v40 = vperm.slane %v37, 1
  %vm43 = vcmask 261120
  %v45 = vsel %vm43, %v28, 0
  %47 = vmatpush.msra.mxu0 0.0
  %48 = vmatpush.msra.mxu0 0.0
  %49 = vmatpush.msra.mxu0 0.0
  %50 = vmatpush.msra.mxu0 0.0
  %51 = vmatpush.msra.mxu0 0.0
  %52 = vmatpush.msra.mxu0 0.0
  %53 = vmatpush.msra.mxu0 0.0
  %54 = vmatpush.msra.mxu0 0.0
  %55 = vmatpush.msra.mxu0 0.0
  %56 = vmatpush.msra.mxu0 0.0
  %57 = vmatpush.msra.mxu0 0.0
  %58 = vmatpush.msra.mxu0 0.0
  %59 = vmatpush.msra.mxu0 %v35
  %60 = vmatpush.msra.mxu0 %v33
  %61 = vmatpush.msra.mxu0 %v31
  %62 = vmatpush.msra.mxu0 %v29
  %63 = vmatmul.f32.gmra.mxu0 %v45
  %v64 = vpop.f32.mrf.mxu0
  %v65 = vadd.f32 %v39, %v64
  %66 = vdwg.mxu0
  %67 = vmatpush.msra.mxu0 0.0
  %68 = vmatpush.msra.mxu0 0.0
  %69 = vmatpush.msra.mxu0 0.0
  %70 = vmatpush.msra.mxu0 0.0
  %71 = vmatpush.msra.mxu0 0.0
  %72 = vmatpush.msra.mxu0 0.0
  %73 = vmatpush.msra.mxu0 0.0
  %74 = vmatpush.msra.mxu0 0.0
  %75 = vmatpush.msra.mxu0 0.0
  %76 = vmatpush.msra.mxu0 0.0
  %77 = vmatpush.msra.mxu0 0.0
  %78 = vmatpush.msra.mxu0 0.0
  %79 = vmatpush.msra.mxu0 %v36
  %80 = vmatpush.msra.mxu0 %v34
  %81 = vmatpush.msra.mxu0 %v32
  %82 = vmatpush.msra.mxu0 %v30
  %83 = vmatmul.f32.gmra.mxu0 %v45
  %v84 = vpop.f32.mrf.mxu0
  %v85 = vadd.f32 %v40, %v84
  %86 = vdwg.mxu0
  %vm87 = vcmp.gt.f32.partialorder %v65, 0.0
  %vm88 = vcmp.gt.f32.partialorder %v85, 0.0
  %v89 = vmul.f32 %v65, 0.01
  %v90 = vmul.f32 %v85, 0.01
  %v91 = vsel %vm87, %v65, %v89
  %v92 = vsel %vm88, %v85, %v90
  %v93 = vld [vmem:[%s3] sm:$0xff]
  %v94 = vld [vmem:[%s3 + $0x8] sm:$0xff]
  %v95 = vld [vmem:[%s3 + $0x10] sm:$0xff]
  %v96 = vld [vmem:[%s3 + $0x18] sm:$0xff]
  %v97 = vld [vmem:[%s3 + $0x20] sm:$0xff]
  %v98 = vld [vmem:[%s3 + $0x28] sm:$0xff]
  %v99 = vld [vmem:[%s3 + $0x30] sm:$0xff]
  %v100 = vld [vmem:[%s3 + $0x38] sm:$0xff]
  %v101 = vld [vmem:[%s3 + $0x40] sm:$0xff]
  %v102 = vld [vmem:[%s3 + $0x48] sm:$0xff]
  %v103 = vld [vmem:[%s3 + $0x50] sm:$0xff]
  %v104 = vld [vmem:[%s3 + $0x58] sm:$0xff]
  %v105 = vld [vmem:[%s3 + $0x60] sm:$0xff]
  %v106 = vld [vmem:[%s3 + $0x68] sm:$0xff]
  %v107 = vld [vmem:[%s3 + $0x70] sm:$0xff]
  %v108 = vld [vmem:[%s3 + $0x78] sm:$0xff]
  %v109 = vld [vmem:[%s3 + $0x80] sm:$0xff]
  %v110 = vld [vmem:[%s3 + $0x88] sm:$0xff]
  %v111 = vld [vmem:[%s3 + $0x90] sm:$0xff]
  %v112 = vld [vmem:[%s3 + $0x98] sm:$0xff]
  %v113 = vld [vmem:[%s3 + $0xa0] sm:$0xff]
  %v114 = vld [vmem:[%s3 + $0xa8] sm:$0xff]
  %v115 = vld [vmem:[%s3 + $0xb0] sm:$0xff]
  %v116 = vld [vmem:[%s3 + $0xb8] sm:$0xff]
  %v117 = vld [vmem:[%s3 + $0xc0] sm:$0xff]
  %v118 = vld [vmem:[%s3 + $0xc8] sm:$0xff]
  %v119 = vld [vmem:[%s3 + $0xd0] sm:$0xff]
  %v120 = vld [vmem:[%s3 + $0xd8] sm:$0xff]
  %v121 = vld [vmem:[%s3 + $0xe0] sm:$0xff]
  %v122 = vld [vmem:[%s3 + $0xe8] sm:$0xff]
  %v123 = vld [vmem:[%s3 + $0xf0] sm:$0xff]
  %v124 = vld [vmem:[%s3 + $0xf8] sm:$0xff]
  %v125 = vld [vmem:[%s4] sm:$0x1]
  %v127 = vperm.slane %v125, 0
  %129 = vmatpush.msra.mxu0 %v108
  %130 = vmatpush.msra.mxu0 %v107
  %131 = vmatpush.msra.mxu0 %v106
  %132 = vmatpush.msra.mxu0 %v105
  %133 = vmatpush.msra.mxu0 %v104
  %134 = vmatpush.msra.mxu0 %v103
  %135 = vmatpush.msra.mxu0 %v102
  %136 = vmatpush.msra.mxu0 %v101
  %137 = vmatpush.msra.mxu0 %v100
  %138 = vmatpush.msra.mxu0 %v99
  %139 = vmatpush.msra.mxu0 %v98
  %140 = vmatpush.msra.mxu0 %v97
  %141 = vmatpush.msra.mxu0 %v96
  %142 = vmatpush.msra.mxu0 %v95
  %143 = vmatpush.msra.mxu0 %v94
  %144 = vmatpush.msra.mxu0 %v93
  %145 = vmatmul.f32.gmra.mxu0 %v91
  %v146 = vpop.f32.mrf.mxu0
  %v147 = vadd.f32 %v127, %v146
  %148 = vdwg.mxu0
  %149 = vmatpush.msra.mxu0 %v124
  %150 = vmatpush.msra.mxu0 %v123
  %151 = vmatpush.msra.mxu0 %v122
  %152 = vmatpush.msra.mxu0 %v121
  %153 = vmatpush.msra.mxu0 %v120
  %154 = vmatpush.msra.mxu0 %v119
  %155 = vmatpush.msra.mxu0 %v118
  %156 = vmatpush.msra.mxu0 %v117
  %157 = vmatpush.msra.mxu0 %v116
  %158 = vmatpush.msra.mxu0 %v115
  %159 = vmatpush.msra.mxu0 %v114
  %160 = vmatpush.msra.mxu0 %v113
  %161 = vmatpush.msra.mxu0 %v112
  %162 = vmatpush.msra.mxu0 %v111
  %163 = vmatpush.msra.mxu0 %v110
  %164 = vmatpush.msra.mxu0 %v109
  %165 = vmatmul.f32.gmra.mxu0 %v92
  %v166 = vpop.f32.mrf.mxu0
  %v167 = vadd.f32 %v147, %v166
  %168 = vdwg.mxu0
  %vm169 = vcmp.gt.f32.partialorder %v167, 0.0
  %v170 = vmul.f32 %v167, 0.01
  %v171 = vsel %vm169, %v167, %v170
  %vm172 = vcmask 818176
  %173 = vst.msk [vmem:[%s7] sm:$0xff] %vm172, %v171
  %v174 = vld [vmem:[%s5] sm:$0xff]
  %v175 = vld [vmem:[%s5 + $0x8] sm:$0xff]
  %v176 = vld [vmem:[%s5 + $0x10] sm:$0xff]
  %v177 = vld [vmem:[%s5 + $0x18] sm:$0xff]
  %v178 = vld [vmem:[%s5 + $0x20] sm:$0xff]
  %v179 = vld [vmem:[%s5 + $0x28] sm:$0xff]
  %v180 = vld [vmem:[%s5 + $0x30] sm:$0xff]
  %v181 = vld [vmem:[%s5 + $0x38] sm:$0xff]
  %v182 = vld [vmem:[%s5 + $0x40] sm:$0xff]
  %v183 = vld [vmem:[%s5 + $0x48] sm:$0xff]
  %v184 = vld [vmem:[%s5 + $0x50] sm:$0xff]
  %v185 = vld [vmem:[%s5 + $0x58] sm:$0xff]
  %v186 = vld [vmem:[%s5 + $0x60] sm:$0xf]
  %v187 = vld [vmem:[%s6] sm:$0x1]
  %v189 = vperm.slane %v187, 0
  %v192 = vsel %vm172, %v171, 0
  %vm194 = vcmask 1043456
  %v196 = vsel %vm194, %v186, 0
  %198 = vmatpush.msra.mxu0 0.0
  %199 = vmatpush.msra.mxu0 0.0
  %200 = vmatpush.msra.mxu0 0.0
  %201 = vmatpush.msra.mxu0 %v196
  %202 = vmatpush.msra.mxu0 %v185
  %203 = vmatpush.msra.mxu0 %v184
  %204 = vmatpush.msra.mxu0 %v183
  %205 = vmatpush.msra.mxu0 %v182
  %206 = vmatpush.msra.mxu0 %v181
  %207 = vmatpush.msra.mxu0 %v180
  %208 = vmatpush.msra.mxu0 %v179
  %209 = vmatpush.msra.mxu0 %v178
  %210 = vmatpush.msra.mxu0 %v177
  %211 = vmatpush.msra.mxu0 %v176
  %212 = vmatpush.msra.mxu0 %v175
  %213 = vmatpush.msra.mxu0 %v174
  %214 = vmatmul.f32.gmra.mxu0 %v192
  %v215 = vpop.f32.mrf.mxu0
  %v216 = vadd.f32 %v189, %v215
  %217 = vdwg.mxu0
  %vm218 = vcmask 80896
  %219 = vst.msk [vmem:[%s8] sm:$0xff] %vm218, %v216
  // Predicated region
  $region30: #{image_classifier_forward.1} parent=0 // pred_check
    _
  $region31: #{image_classifier_forward.1} parent=0 // pred_check_branch
    %221 = sbr.rel (0) target = $region33
  $region32: #{image_classifier_forward.1} parent=0 // pred_region
    _
  $region33: #{image_classifier_forward.1} parent=0 // pred_fallthru
    _
  // Predicated region
  $region34: #{image_classifier_forward.1} parent=0 // pred_check
    _
  $region35: #{image_classifier_forward.1} parent=0 // pred_check_branch
    %223 = sbr.rel (0) target = $region37
  $region36: #{image_classifier_forward.1} parent=0 // pred_region
    _
  $region37: #{image_classifier_forward.1} parent=0 // pred_fallthru
    _
  // Predicated region
  $region38: #{image_classifier_forward.1} parent=0 // pred_check
    _
  $region39: #{image_classifier_forward.1} parent=0 // pred_check_branch
    %225 = sbr.rel (0) target = $region41
  $region40: #{image_classifier_forward.1} parent=0 // pred_region
    _
  $region41: #{image_classifier_forward.1} parent=0 // pred_fallthru
    _
  // Predicated region
  $region42: #{image_classifier_forward.1} parent=0 // pred_check
    _
  $region43: #{image_classifier_forward.1} parent=0 // pred_check_branch
    %227 = sbr.rel (0) target = $region45
  $region44: #{image_classifier_forward.1} parent=0 // pred_region
    _
  $region45: #{image_classifier_forward.1} parent=0 // pred_fallthru
    _

</llo_original>
